<compile_context>
chip_gen: v7x
topology: tpu7x:2x2x1
jax: 0.10.0
libtpu: 0.0.40
codegen_flags: <defaults>
</compile_context>

<pallas_src>
import functools

import jax
import jax.numpy as jnp
import numpy as np
from jax.experimental import pallas as pl
from jax.experimental.pallas import tpu as pltpu


def _round_up(x, m):
    return ((x + m - 1) // m) * m


# ---------------------------------------------------------------------------
# Fused ACE block kernel (the shape the PyTorch forward actually admits).
# ---------------------------------------------------------------------------
def _fused_ace_kernel(x_ref, w1_ref, b1_ref, w2_ref, b2_ref,
                      w3_ref, b3_ref, w4_ref, b4_ref, o_ref, xk_ref):
    """Four chained matmul + bias + ReLU, all operands resident in VMEM.

    The activation arrives un-padded (tm, cin) f32; its bf16 cast and K
    zero-pad to (tm, cin_p) happen in the VMEM scratch `xk_ref` (never in HBM).
    bf16 MXU operands, f32 accumulation, f32 bias+ReLU epilogue, bf16 store.
    """
    cin = x_ref.shape[1]
    xk_ref[...] = jnp.zeros(xk_ref.shape, xk_ref.dtype)      # defines K padding
    xk_ref[:, :cin] = x_ref[...].astype(jnp.bfloat16)        # masked lane store

    def layer(h_bf16, w_ref, b_ref):
        acc = jnp.dot(h_bf16, w_ref[...], preferred_element_type=jnp.float32)
        return jnp.maximum(acc + b_ref[...], 0.0)             # f32 epilogue

    h = layer(xk_ref[...], w1_ref, b1_ref)                    # conv1 centre tap
    h = layer(h.astype(jnp.bfloat16), w2_ref, b2_ref)         # conv2
    h = layer(h.astype(jnp.bfloat16), w3_ref, b3_ref)         # conv3
    h = layer(h.astype(jnp.bfloat16), w4_ref, b4_ref)         # transition Linear
    o_ref[...] = h.astype(o_ref.dtype)                        # bf16 lane-dense


def _pick_tm(n):
    """Row tile: >=2 grid steps when n > 8 (v7x megacore), up to 1024 rows."""
    if n <= 8:
        return n                               # launch-overhead bound anyway
    return min(1024, _round_up((n + 1) // 2, 8))


def ace_block_forward(x_ncdhw, params, out_dtype=jnp.bfloat16):
    """ACEBlock forward, NCDHW input (requires D*H*W == 1, as the model does)."""
    n, cin, d, h, w = x_ncdhw.shape
    cout = params["conv1_b"].shape[0]
    assert d * h * w == 1, "ACEBlock forward only type-checks with 1x1x1 spatial"

    # With 1x1x1 spatial and padding=1 only the centre tap of each 3x3x3
    # kernel touches real data -> each conv is exactly a (Cin->Cout) matmul.
    x2 = x_ncdhw.reshape(n, cin)               # no pad / cast / copy in HBM

    cin_p = _round_up(cin, 128)
    c_p = _round_up(cout, 128)
    tm = _pick_tm(n)
    grid = (pl.cdiv(n, tm),)

    def center_tap(wc):                        # (Cout,Cin,3,3,3) -> (Cin,Cout)
        return jnp.transpose(wc[:, :, 1, 1, 1], (1, 0))

    def pad_w(wm, kin, kout):                  # weights are tiny: pad in wrapper
        return jnp.zeros((kin, kout), jnp.bfloat16).at[
            :wm.shape[0], :wm.shape[1]].set(wm.astype(jnp.bfloat16))

    def pad_b(bv, kout):
        return jnp.zeros((1, kout), jnp.float32).at[0, :bv.shape[0]].set(
            bv.astype(jnp.float32))

    w1 = pad_w(center_tap(params["conv1_w"]), cin_p, c_p)
    w2 = pad_w(center_tap(params["conv2_w"]), c_p, c_p)
    w3 = pad_w(center_tap(params["conv3_w"]), c_p, c_p)
    w4 = pad_w(params["lin_w"].T, c_p, c_p)               # Linear: x @ W.T + b
    b1, b2, b3 = (pad_b(params[k], c_p) for k in ("conv1_b", "conv2_b", "conv3_b"))
    b4 = pad_b(params["lin_b"], c_p)

    # Constant-index weight/bias blocks: single-buffering (pl.Buffered(1)) and
    # an explicit vmem_limit_bytes only matter once channel counts grow; at
    # c_p=128 total VMEM use is <1 MiB so defaults are kept.
    wspec1 = pl.BlockSpec((cin_p, c_p), lambda i: (0, 0))
    wspec = pl.BlockSpec((c_p, c_p), lambda i: (0, 0))
    bspec = pl.BlockSpec((1, c_p), lambda i: (0, 0))

    out = pl.pallas_call(
        _fused_ace_kernel,
        out_shape=jax.ShapeDtypeStruct((n, c_p), out_dtype),
        grid=grid,
        in_specs=[
            pl.BlockSpec((tm, cin), lambda i: (i, 0)),   # (tm, cin) rows, no pad
            wspec1, bspec, wspec, bspec, wspec, bspec, wspec, bspec,
        ],
        out_specs=pl.BlockSpec((tm, c_p), lambda i: (i, 0)),
        scratch_shapes=[pltpu.VMEM((tm, cin_p), jnp.bfloat16)],
        compiler_params=pltpu.CompilerParams(
            dimension_semantics=("parallel",)),
    )(x2, w1, b1, w2, b2, w3, b3, w4, b4)

    return out[:, :cout]                        # un-pad lanes once, bf16 out


# ---------------------------------------------------------------------------
# General Conv3d(k=3, s=1, p=1) + ReLU — tiled, no HBM im2col, no batch loop.
# ---------------------------------------------------------------------------
def _conv_tap_kernel(a_cur_ref, a_nxt_ref, w_ref, b_ref, o_ref, win_ref, *,
                     offs, cin):
    """One (batch, row-tile) of the conv: 27 accumulating MXU matmuls.

    a_cur_ref / a_nxt_ref: (1,1,tr,cin) bf16 — current tile and the next tile
    (halo source).  win_ref: (tr+halo_p, cin_p) bf16 VMEM window, zero-filled
    each step (re-establishes the zero-tail / K-padding invariant per tile).
    """
    tr = o_ref.shape[2]
    halo_p = win_ref.shape[0] - tr

    win_ref[...] = jnp.zeros(win_ref.shape, win_ref.dtype)
    win_ref[:tr, :cin] = a_cur_ref[0, 0, :, :]
    win_ref[tr:, :cin] = a_nxt_ref[0, 0, :halo_p, :]

    acc = jnp.zeros((tr, o_ref.shape[-1]), jnp.float32)
    # TODO(synk): for cin << 128 true K-packing (27*cin into one K=128 matmul)
    # would cut MXU pushes ~27x; kept per-tap here to avoid unaligned lane
    # concatenation in-kernel.  kd/kh offsets are 8-aligned (wp8 stride); the
    # residual kw in {1,2} shifts are the only sublane-misaligned slices left.
    for t, off in enumerate(offs):
        acc = acc + jnp.dot(win_ref[off:off + tr, :], w_ref[t],
                            preferred_element_type=jnp.float32)
    o_ref[0, 0, :, :] = jnp.maximum(acc + b_ref[...], 0.0).astype(o_ref.dtype)


def conv3d_relu(x_ndhwc, w, b, *, tr=128, out_dtype=jnp.float32):
    """General 3-D conv (kernel 3, stride 1, padding 1) + ReLU, channels-last.

    Tap (kd,kh,kw) is a constant row offset kd*hp*wp8 + kh*wp8 + kw in the
    zero-padded, spatially-flattened layout (wp8 = W+2 rounded up to 8 so the
    kd/kh offsets are sublane-aligned).  The grid tiles (batch, flat rows);
    each step stitches its row tile plus a halo from the next tile into a VMEM
    window, so VMEM use is bounded independent of D*H*W and the 27x im2col
    tensor is never written to HBM.  Border rows compute garbage from the zero
    padding and are discarded by the final slice.
    """
    n, d, h, wd, cin = x_ndhwc.shape
    cout = w.shape[0]
    dp, hp = d + 2, h + 2
    wp8 = _round_up(wd + 2, 8)              # aligned flat row stride
    rows = dp * hp * wp8                    # rows per batch in padded layout
    halo = 2 * hp * wp8 + 2 * wp8 + 2       # largest tap row offset
    halo_p = _round_up(halo, 8)
    tr = max(_round_up(tr, 8), halo_p)      # halo must fit inside the next tile
    nt = pl.cdiv(rows, tr)                  # computed row tiles per batch
    cin_p, cout_p = _round_up(cin, 128), _round_up(cout, 128)

    # Padded channels-last flat layout, bf16, cin NOT lane-padded in HBM.
    xp = jnp.zeros((n, dp, hp, wp8, cin), jnp.bfloat16)
    xp = xp.at[:, 1:d + 1, 1:h + 1, 1:wd + 1, :].set(x_ndhwc.astype(jnp.bfloat16))
    a = xp.reshape(n, rows, cin)
    pad_rows = (nt + 1) * tr - rows         # +1 trailing all-zero tile = halo src
    a = jnp.concatenate([a, jnp.zeros((n, pad_rows, cin), jnp.bfloat16)], axis=1)
    a = a.reshape(n, nt + 1, tr, cin)

    # Tap-major (kd,kh,kw) weight slabs; K lanes >= cin are zero.
    wmat = jnp.transpose(w, (2, 3, 4, 1, 0)).reshape(27, cin, cout)
    w_p = jnp.zeros((27, cin_p, cout_p), jnp.bfloat16).at[:, :cin, :cout].set(
        wmat.astype(jnp.bfloat16))
    b_p = jnp.zeros((1, cout_p), jnp.float32).at[0, :cout].set(
        b.astype(jnp.float32))

    offs = tuple(kd * hp * wp8 + kh * wp8 + kw
                 for kd in range(3) for kh in range(3) for kw in range(3))

    out = pl.pallas_call(
        functools.partial(_conv_tap_kernel, offs=offs, cin=cin),
        out_shape=jax.ShapeDtypeStruct((n, nt, tr, cout_p), jnp.bfloat16),
        grid=(n, nt),
        in_specs=[
            pl.BlockSpec((1, 1, tr, cin), lambda bi, j: (bi, j, 0, 0)),
            pl.BlockSpec((1, 1, tr, cin), lambda bi, j: (bi, j + 1, 0, 0)),
            pl.BlockSpec((27, cin_p, cout_p), lambda bi, j: (0, 0, 0)),
            pl.BlockSpec((1, cout_p), lambda bi, j: (0, 0)),
        ],
        out_specs=pl.BlockSpec((1, 1, tr, cout_p), lambda bi, j: (bi, j, 0, 0)),
        scratch_shapes=[pltpu.VMEM((tr + halo_p, cin_p), jnp.bfloat16)],
        compiler_params=pltpu.CompilerParams(
            dimension_semantics=("parallel", "parallel")),
        # For very large channel counts, set vmem_limit_bytes explicitly and
        # budget against v7x's 64 MiB physical / 32 MiB default scoped VMEM.
    )(a, a, w_p, b_p)

    y = out.reshape(n, nt * tr, cout_p)[:, :rows, :cout]
    y = y.reshape(n, dp, hp, wp8, cout)[:, :d, :h, :wd, :]
    return y.astype(out_dtype)


# ---------------------------------------------------------------------------
# Pure-JAX references.
# ---------------------------------------------------------------------------
def _ref_conv3d_relu(x_ndhwc, w, b):
    wd = jnp.transpose(w, (2, 3, 4, 1, 0))   # DHWIO
    y = jax.lax.conv_general_dilated(
        x_ndhwc, wd, window_strides=(1, 1, 1),
        padding=((1, 1), (1, 1), (1, 1)),
        dimension_numbers=("NDHWC", "DHWIO", "NDHWC"))
    return jax.nn.relu(y + b)


def _ref_forward(x_ncdhw, params):
    """Pure-JAX reference matching the PyTorch ACEBlock forward."""
    x = jnp.transpose(x_ncdhw, (0, 2, 3, 4, 1))
    x = _ref_conv3d_relu(x, params["conv1_w"], params["conv1_b"])
    x = _ref_conv3d_relu(x, params["conv2_w"], params["conv2_b"])
    x = _ref_conv3d_relu(x, params["conv3_w"], params["conv3_b"])
    n = x.shape[0]
    flat = jnp.transpose(x, (0, 4, 1, 2, 3)).reshape(n, -1)
    return jax.nn.relu(flat @ params["lin_w"].T + params["lin_b"])


if __name__ == "__main__":
    cin, cout = 4, 32
    key = jax.random.PRNGKey(0)
    ks = jax.random.split(key, 11)
    params = {
        "conv1_w": 0.1 * jax.random.normal(ks[0], (cout, cin, 3, 3, 3), jnp.float32),
        "conv1_b": 0.1 * jax.random.normal(ks[1], (cout,), jnp.float32),
        "conv2_w": 0.1 * jax.random.normal(ks[2], (cout, cout, 3, 3, 3), jnp.float32),
        "conv2_b": 0.1 * jax.random.normal(ks[3], (cout,), jnp.float32),
        "conv3_w": 0.1 * jax.random.normal(ks[4], (cout, cout, 3, 3, 3), jnp.float32),
        "conv3_b": 0.1 * jax.random.normal(ks[5], (cout,), jnp.float32),
        "lin_w": 0.1 * jax.random.normal(ks[6], (cout, cout), jnp.float32),
        "lin_b": 0.1 * jax.random.normal(ks[7], (cout,), jnp.float32),
    }

    # 1) Fused ACE block (the model path): tiny batch (single grid step) and a
    #    batch that exercises >=2 grid steps with a masked edge tile.
    for batch, xkey in ((2, ks[8]), (20, ks[9])):
        x = jax.random.normal(xkey, (batch, cin, 1, 1, 1), jnp.float32)
        out = jax.block_until_ready(ace_block_forward(x, params))
        ref = jax.block_until_ready(_ref_forward(x, params))
        assert out.shape == (batch, cout)
        np.testing.assert_allclose(np.asarray(out.astype(jnp.float32)),
                                   np.asarray(ref), rtol=2e-2, atol=2e-2)

    # 2) General-spatial conv path (tiled, no HBM im2col), self-test.
    dc = hc = wc = 4
    xc = jax.random.normal(ks[10], (2, dc, hc, wc, cin), jnp.float32)
    yc = jax.block_until_ready(
        conv3d_relu(xc, params["conv1_w"], params["conv1_b"]))
    yc_ref = jax.block_until_ready(
        _ref_conv3d_relu(xc, params["conv1_w"], params["conv1_b"]))
    np.testing.assert_allclose(np.asarray(yc), np.asarray(yc_ref),
                               rtol=2e-2, atol=2e-2)

    print("KERNEL_OK")
</pallas_src>

<mosaic_0001>
module attributes {stable_mosaic.version = 11 : i64} {
  func.func @_fused_ace_kernel(%arg0: i32, %arg1: memref<2x4xf32, #tpu.memory_space<vmem>>, %arg2: memref<128x128xbf16, #tpu.memory_space<vmem>>, %arg3: memref<1x128xf32, #tpu.memory_space<vmem>>, %arg4: memref<128x128xbf16, #tpu.memory_space<vmem>>, %arg5: memref<1x128xf32, #tpu.memory_space<vmem>>, %arg6: memref<128x128xbf16, #tpu.memory_space<vmem>>, %arg7: memref<1x128xf32, #tpu.memory_space<vmem>>, %arg8: memref<128x128xbf16, #tpu.memory_space<vmem>>, %arg9: memref<1x128xf32, #tpu.memory_space<vmem>>, %arg10: memref<2x128xbf16, #tpu.memory_space<vmem>>, %arg11: memref<2x128xbf16, #tpu.memory_space<vmem>>) attributes {dimension_semantics = [#tpu.dimension_semantics<parallel>], iteration_bounds = array<i64: 1>, scalar_prefetch = 0 : i64, scratch_operands = 1 : i64, tpu.core_type = #tpu.core_type<tc>, window_params = [{transform_indices = @transform_0, window_bounds = array<i64: 2, 4>}, {pipeline_mode = #tpu.pipeline_mode<synchronous>, transform_indices = @transform_1, window_bounds = array<i64: 128, 128>}, {pipeline_mode = #tpu.pipeline_mode<synchronous>, transform_indices = @transform_2, window_bounds = array<i64: 1, 128>}, {pipeline_mode = #tpu.pipeline_mode<synchronous>, transform_indices = @transform_3, window_bounds = array<i64: 128, 128>}, {pipeline_mode = #tpu.pipeline_mode<synchronous>, transform_indices = @transform_4, window_bounds = array<i64: 1, 128>}, {pipeline_mode = #tpu.pipeline_mode<synchronous>, transform_indices = @transform_5, window_bounds = array<i64: 128, 128>}, {pipeline_mode = #tpu.pipeline_mode<synchronous>, transform_indices = @transform_6, window_bounds = array<i64: 1, 128>}, {pipeline_mode = #tpu.pipeline_mode<synchronous>, transform_indices = @transform_7, window_bounds = array<i64: 128, 128>}, {pipeline_mode = #tpu.pipeline_mode<synchronous>, transform_indices = @transform_8, window_bounds = array<i64: 1, 128>}, {transform_indices = @transform_9, window_bounds = array<i64: 2, 128>}]} {
    %cst = arith.constant 0.000000e+00 : bf16
    %0 = vector.broadcast %cst : bf16 to vector<2x128xbf16>
    %c0 = arith.constant 0 : index
    %c0_0 = arith.constant 0 : index
    %1 = vector.load %arg11[%c0, %c0_0] : memref<2x128xbf16, #tpu.memory_space<vmem>>, vector<2x128xbf16>
    tpu.vector_store %arg11[%c0, %c0_0], %0 {strides = array<i32>} : memref<2x128xbf16, #tpu.memory_space<vmem>>, vector<2x128xbf16>,
    %c0_1 = arith.constant 0 : index
    %c0_2 = arith.constant 0 : index
    %2 = vector.load %arg1[%c0_1, %c0_2] : memref<2x4xf32, #tpu.memory_space<vmem>>, vector<2x4xf32>
    %3 = arith.truncf %2 : vector<2x4xf32> to vector<2x4xbf16>
    %c0_3 = arith.constant 0 : index
    %c0_4 = arith.constant 0 : index
    %4 = vector.load %arg11[%c0_3, %c0_4] : memref<2x128xbf16, #tpu.memory_space<vmem>>, vector<2x4xbf16>
    tpu.vector_store %arg11[%c0_3, %c0_4], %3 {strides = array<i32>} : memref<2x128xbf16, #tpu.memory_space<vmem>>, vector<2x4xbf16>,
    %c0_5 = arith.constant 0 : index
    %c0_6 = arith.constant 0 : index
    %5 = vector.load %arg11[%c0_5, %c0_6] : memref<2x128xbf16, #tpu.memory_space<vmem>>, vector<2x128xbf16>
    %c0_7 = arith.constant 0 : index
    %c0_8 = arith.constant 0 : index
    %6 = vector.load %arg2[%c0_7, %c0_8] : memref<128x128xbf16, #tpu.memory_space<vmem>>, vector<128x128xbf16>
    %cst_9 = arith.constant dense<0.000000e+00> : vector<2x128xf32>
    %7 = tpu.matmul %5, %6, %cst_9 {dimension_numbers = #tpu.dot_dimension_numbers<[1], [0], [0], [1], [0, 0, 1, 1], [], []>} : vector<2x128xbf16>, vector<128x128xbf16>, vector<2x128xf32> -> vector<2x128xf32>
    %c0_10 = arith.constant 0 : index
    %c0_11 = arith.constant 0 : index
    %8 = vector.load %arg3[%c0_10, %c0_11] : memref<1x128xf32, #tpu.memory_space<vmem>>, vector<1x128xf32>
    %9 = vector.broadcast %8 : vector<1x128xf32> to vector<2x128xf32>
    %10 = arith.addf %7, %9 : vector<2x128xf32>
    %cst_12 = arith.constant 0.000000e+00 : f32
    %11 = vector.broadcast %cst_12 : f32 to vector<2x128xf32>
    %12 = arith.maximumf %10, %11 : vector<2x128xf32>
    %13 = arith.truncf %12 : vector<2x128xf32> to vector<2x128xbf16>
    %c0_13 = arith.constant 0 : index
    %c0_14 = arith.constant 0 : index
    %14 = vector.load %arg4[%c0_13, %c0_14] : memref<128x128xbf16, #tpu.memory_space<vmem>>, vector<128x128xbf16>
    %cst_15 = arith.constant dense<0.000000e+00> : vector<2x128xf32>
    %15 = tpu.matmul %13, %14, %cst_15 {dimension_numbers = #tpu.dot_dimension_numbers<[1], [0], [0], [1], [0, 0, 1, 1], [], []>} : vector<2x128xbf16>, vector<128x128xbf16>, vector<2x128xf32> -> vector<2x128xf32>
    %c0_16 = arith.constant 0 : index
    %c0_17 = arith.constant 0 : index
    %16 = vector.load %arg5[%c0_16, %c0_17] : memref<1x128xf32, #tpu.memory_space<vmem>>, vector<1x128xf32>
    %17 = vector.broadcast %16 : vector<1x128xf32> to vector<2x128xf32>
    %18 = arith.addf %15, %17 : vector<2x128xf32>
    %cst_18 = arith.constant 0.000000e+00 : f32
    %19 = vector.broadcast %cst_18 : f32 to vector<2x128xf32>
    %20 = arith.maximumf %18, %19 : vector<2x128xf32>
    %21 = arith.truncf %20 : vector<2x128xf32> to vector<2x128xbf16>
    %c0_19 = arith.constant 0 : index
    %c0_20 = arith.constant 0 : index
    %22 = vector.load %arg6[%c0_19, %c0_20] : memref<128x128xbf16, #tpu.memory_space<vmem>>, vector<128x128xbf16>
    %cst_21 = arith.constant dense<0.000000e+00> : vector<2x128xf32>
    %23 = tpu.matmul %21, %22, %cst_21 {dimension_numbers = #tpu.dot_dimension_numbers<[1], [0], [0], [1], [0, 0, 1, 1], [], []>} : vector<2x128xbf16>, vector<128x128xbf16>, vector<2x128xf32> -> vector<2x128xf32>
    %c0_22 = arith.constant 0 : index
    %c0_23 = arith.constant 0 : index
    %24 = vector.load %arg7[%c0_22, %c0_23] : memref<1x128xf32, #tpu.memory_space<vmem>>, vector<1x128xf32>
    %25 = vector.broadcast %24 : vector<1x128xf32> to vector<2x128xf32>
    %26 = arith.addf %23, %25 : vector<2x128xf32>
    %cst_24 = arith.constant 0.000000e+00 : f32
    %27 = vector.broadcast %cst_24 : f32 to vector<2x128xf32>
    %28 = arith.maximumf %26, %27 : vector<2x128xf32>
    %29 = arith.truncf %28 : vector<2x128xf32> to vector<2x128xbf16>
    %c0_25 = arith.constant 0 : index
    %c0_26 = arith.constant 0 : index
    %30 = vector.load %arg8[%c0_25, %c0_26] : memref<128x128xbf16, #tpu.memory_space<vmem>>, vector<128x128xbf16>
    %cst_27 = arith.constant dense<0.000000e+00> : vector<2x128xf32>
    %31 = tpu.matmul %29, %30, %cst_27 {dimension_numbers = #tpu.dot_dimension_numbers<[1], [0], [0], [1], [0, 0, 1, 1], [], []>} : vector<2x128xbf16>, vector<128x128xbf16>, vector<2x128xf32> -> vector<2x128xf32>
    %c0_28 = arith.constant 0 : index
    %c0_29 = arith.constant 0 : index
    %32 = vector.load %arg9[%c0_28, %c0_29] : memref<1x128xf32, #tpu.memory_space<vmem>>, vector<1x128xf32>
    %33 = vector.broadcast %32 : vector<1x128xf32> to vector<2x128xf32>
    %34 = arith.addf %31, %33 : vector<2x128xf32>
    %cst_30 = arith.constant 0.000000e+00 : f32
    %35 = vector.broadcast %cst_30 : f32 to vector<2x128xf32>
    %36 = arith.maximumf %34, %35 : vector<2x128xf32>
    %37 = arith.truncf %36 : vector<2x128xf32> to vector<2x128xbf16>
    %c0_31 = arith.constant 0 : index
    %c0_32 = arith.constant 0 : index
    %38 = vector.load %arg10[%c0_31, %c0_32] : memref<2x128xbf16, #tpu.memory_space<vmem>>, vector<2x128xbf16>
    tpu.vector_store %arg10[%c0_31, %c0_32], %37 {strides = array<i32>} : memref<2x128xbf16, #tpu.memory_space<vmem>>, vector<2x128xbf16>,
    return
  }
  func.func @transform_0(%arg0: i32) -> (i32, i32) {
    %c0_i32 = arith.constant 0 : i32
    %c0_i32_0 = arith.constant 0 : i32
    return %arg0, %c0_i32 : i32, i32
  }
  func.func @transform_1(%arg0: i32) -> (i32, i32) {
    %c0_i32 = arith.constant 0 : i32
    %c0_i32_0 = arith.constant 0 : i32
    %c0_i32_1 = arith.constant 0 : i32
    return %c0_i32, %c0_i32_0 : i32, i32
  }
  func.func @transform_2(%arg0: i32) -> (i32, i32) {
    %c0_i32 = arith.constant 0 : i32
    %c0_i32_0 = arith.constant 0 : i32
    %c0_i32_1 = arith.constant 0 : i32
    return %c0_i32, %c0_i32_0 : i32, i32
  }
  func.func @transform_3(%arg0: i32) -> (i32, i32) {
    %c0_i32 = arith.constant 0 : i32
    %c0_i32_0 = arith.constant 0 : i32
    %c0_i32_1 = arith.constant 0 : i32
    return %c0_i32, %c0_i32_0 : i32, i32
  }
  func.func @transform_4(%arg0: i32) -> (i32, i32) {
    %c0_i32 = arith.constant 0 : i32
    %c0_i32_0 = arith.constant 0 : i32
    %c0_i32_1 = arith.constant 0 : i32
    return %c0_i32, %c0_i32_0 : i32, i32
  }
  func.func @transform_5(%arg0: i32) -> (i32, i32) {
    %c0_i32 = arith.constant 0 : i32
    %c0_i32_0 = arith.constant 0 : i32
    %c0_i32_1 = arith.constant 0 : i32
    return %c0_i32, %c0_i32_0 : i32, i32
  }
  func.func @transform_6(%arg0: i32) -> (i32, i32) {
    %c0_i32 = arith.constant 0 : i32
    %c0_i32_0 = arith.constant 0 : i32
    %c0_i32_1 = arith.constant 0 : i32
    return %c0_i32, %c0_i32_0 : i32, i32
  }
  func.func @transform_7(%arg0: i32) -> (i32, i32) {
    %c0_i32 = arith.constant 0 : i32
    %c0_i32_0 = arith.constant 0 : i32
    %c0_i32_1 = arith.constant 0 : i32
    return %c0_i32, %c0_i32_0 : i32, i32
  }
  func.func @transform_8(%arg0: i32) -> (i32, i32) {
    %c0_i32 = arith.constant 0 : i32
    %c0_i32_0 = arith.constant 0 : i32
    %c0_i32_1 = arith.constant 0 : i32
    return %c0_i32, %c0_i32_0 : i32, i32
  }
  func.func @transform_9(%arg0: i32) -> (i32, i32) {
    %c0_i32 = arith.constant 0 : i32
    %c0_i32_0 = arith.constant 0 : i32
    return %arg0, %c0_i32 : i32, i32
  }
}

</mosaic_0001>

<llo_original>
// kernel: tpu_custom_call.1
$region0: #{tpu_custom_call.1}
  #allocation0 [shape = 'u32[]', space=smem, size = 0x4, offset = 0x4, fixed_abs, tag = 'smem constant byte address 0x4 - core index']
  #allocation1 [shape = 'u32[144,128]{1,0:T(1,128)}', space=vmem, size = 0x12000, scoped, tag = 'internal scratch']
  #allocation2 [shape = 'bf16[2,128]{1,0:T(2,128)(2,1)}', space=vmem, size = 0x200, scoped, tag = 'scratch operand']
  %s0 = inlined_call_operand.hbm [shape: f32[2,4], index: 0, kind: input, shape index: {}]
  %s1 = inlined_call_operand.hbm [shape: bf16[128,128], index: 1, kind: input, shape index: {}]
  %s2 = inlined_call_operand.vmem [shape: f32[1,128], index: 2, kind: input, shape index: {}]
  %s3 = inlined_call_operand.hbm [shape: bf16[128,128], index: 3, kind: input, shape index: {}]
  %s4 = inlined_call_operand.vmem [shape: f32[1,128], index: 4, kind: input, shape index: {}]
  %s5 = inlined_call_operand.hbm [shape: bf16[128,128], index: 5, kind: input, shape index: {}]
  %s6 = inlined_call_operand.vmem [shape: f32[1,128], index: 6, kind: input, shape index: {}]
  %s7 = inlined_call_operand.hbm [shape: bf16[128,128], index: 7, kind: input, shape index: {}]
  %s8 = inlined_call_operand.vmem [shape: f32[1,128], index: 8, kind: input, shape index: {}]
  %s9 = inlined_call_operand.hbm [shape: bf16[2,128], index: 9, kind: output, shape index: {}]
  %s10 = sld [smem:[#allocation0]]
  $region66: #{tpu_custom_call.1} parent=0
    _
  %s12 = ssub.s32 1, %s10
  %s13 = scalar_select 0, %s12, %s10
  $region1: #{tpu_custom_call.1} parent=0
    #allocation3 [shape = 'u8[1024]{0}', space=vmem, size = 0x400, scoped, tag = 'input window, operand 0, single buffered']
    #allocation4 [shape = 's32[1]{0}', space=sflag, size = 0x4, scoped, tag = 'scoped memory for tpu_custom_call.1']
    #allocation5 [shape = 's32[1]{0}', space=sflag, size = 0x4, scoped, tag = 'scoped memory for tpu_custom_call.1']
    #allocation6 [shape = 'u8[32768]{0}', space=vmem, size = 0x8000, scoped, tag = 'input window, operand 1, single buffered']
    #allocation7 [shape = 's32[1]{0}', space=sflag, size = 0x4, scoped, tag = 'scoped memory for tpu_custom_call.1']
    #allocation8 [shape = 'u8[32768]{0}', space=vmem, size = 0x8000, scoped, tag = 'input window, operand 3, single buffered']
    #allocation9 [shape = 'u8[32768]{0}', space=vmem, size = 0x8000, scoped, tag = 'input window, operand 5, single buffered']
    #allocation10 [shape = 's32[1]{0}', space=sflag, size = 0x4, scoped, tag = 'scoped memory for tpu_custom_call.1']
    #allocation11 [shape = 'u8[32768]{0}', space=vmem, size = 0x8000, scoped, tag = 'input window, operand 7, single buffered']
    #allocation12 [shape = 'u8[512]{0}', space=vmem, size = 0x400, scoped, tag = 'output window, operand 0, single buffered']
    %14 = vsyncpa [#allocation4], 0
    %15 = vsyncpa [#allocation7], 0
    %16 = vsyncpa [#allocation10], 0
    %17 = vsyncpa [#allocation5], 0
    // Predicated region
    $region2: #{tpu_custom_call.1} parent=1 // pred_check
      _
    $region3: #{tpu_custom_call.1} parent=1 // pred_check_branch
      %19 = sbr.rel (0) target = $region5
    $region4: #{tpu_custom_call.1} parent=1 // pred_region
      %s21 = ssub.s32 32, 32
      %22 = vsyncadd [#allocation4], %s21
      %s24 = sshll.u32 [#allocation3], 4
      %s25 = int_to_ptr.vmem [resolvable:$true] %s24
      %27 = dma.hbm_to_vmem [thread:$0]  %s0, 32, %s25, [#allocation4]
    $region5: #{tpu_custom_call.1} parent=1 // pred_fallthru
      _
    // Predicated region
    $region6: #{tpu_custom_call.1} parent=1 // pred_check
      _
    $region7: #{tpu_custom_call.1} parent=1 // pred_check_branch
      %29 = sbr.rel (0) target = $region9
    $region8: #{tpu_custom_call.1} parent=1 // pred_region
      %s31 = ssub.s32 1024, 1024
      %32 = vsyncadd [#allocation7], %s31
      %s33 = sshll.u32 [#allocation6], 4
      %s34 = int_to_ptr.vmem [resolvable:$true] %s33
      %39 = dma.hbm_to_vmem [thread:$0]  %s1, 1024, %s34, [#allocation7], 64, 64, 4
    $region9: #{tpu_custom_call.1} parent=1 // pred_fallthru
      _
    // Predicated region
    $region10: #{tpu_custom_call.1} parent=1 // pred_check
      _
    $region11: #{tpu_custom_call.1} parent=1 // pred_check_branch
      %41 = sbr.rel (0) target = $region13
    $region12: #{tpu_custom_call.1} parent=1 // pred_region
      _
    $region13: #{tpu_custom_call.1} parent=1 // pred_fallthru
      _
    // Predicated region
    $region14: #{tpu_custom_call.1} parent=1 // pred_check
      _
    $region15: #{tpu_custom_call.1} parent=1 // pred_check_branch
      %43 = sbr.rel (0) target = $region17
    $region16: #{tpu_custom_call.1} parent=1 // pred_region
      %s45 = ssub.s32 1024, 1024
      %46 = vsyncadd [#allocation7], %s45
      %s47 = sshll.u32 [#allocation8], 4
      %s48 = int_to_ptr.vmem [resolvable:$true] %s47
      %53 = dma.hbm_to_vmem [thread:$0]  %s3, 1024, %s48, [#allocation7], 64, 64, 4
    $region17: #{tpu_custom_call.1} parent=1 // pred_fallthru
      _
    // Predicated region
    $region18: #{tpu_custom_call.1} parent=1 // pred_check
      _
    $region19: #{tpu_custom_call.1} parent=1 // pred_check_branch
      %55 = sbr.rel (0) target = $region21
    $region20: #{tpu_custom_call.1} parent=1 // pred_region
      _
    $region21: #{tpu_custom_call.1} parent=1 // pred_fallthru
      _
    // Predicated region
    $region22: #{tpu_custom_call.1} parent=1 // pred_check
      _
    $region23: #{tpu_custom_call.1} parent=1 // pred_check_branch
      %57 = sbr.rel (0) target = $region25
    $region24: #{tpu_custom_call.1} parent=1 // pred_region
      %s59 = ssub.s32 1024, 1024
      %60 = vsyncadd [#allocation10], %s59
      %s61 = sshll.u32 [#allocation9], 4
      %s62 = int_to_ptr.vmem [resolvable:$true] %s61
      %67 = dma.hbm_to_vmem [thread:$0]  %s5, 1024, %s62, [#allocation10], 64, 64, 4
    $region25: #{tpu_custom_call.1} parent=1 // pred_fallthru
      _
    // Predicated region
    $region26: #{tpu_custom_call.1} parent=1 // pred_check
      _
    $region27: #{tpu_custom_call.1} parent=1 // pred_check_branch
      %69 = sbr.rel (0) target = $region29
    $region28: #{tpu_custom_call.1} parent=1 // pred_region
      _
    $region29: #{tpu_custom_call.1} parent=1 // pred_fallthru
      _
    // Predicated region
    $region30: #{tpu_custom_call.1} parent=1 // pred_check
      _
    $region31: #{tpu_custom_call.1} parent=1 // pred_check_branch
      %71 = sbr.rel (0) target = $region33
    $region32: #{tpu_custom_call.1} parent=1 // pred_region
      %s73 = ssub.s32 1024, 1024
      %74 = vsyncadd [#allocation10], %s73
      %s75 = sshll.u32 [#allocation11], 4
      %s76 = int_to_ptr.vmem [resolvable:$true] %s75
      %81 = dma.hbm_to_vmem [thread:$0]  %s7, 1024, %s76, [#allocation10], 64, 64, 4
    $region33: #{tpu_custom_call.1} parent=1 // pred_fallthru
      _
    // Predicated region
    $region34: #{tpu_custom_call.1} parent=1 // pred_check
      _
    $region35: #{tpu_custom_call.1} parent=1 // pred_check_branch
      %83 = sbr.rel (0) target = $region37
    $region36: #{tpu_custom_call.1} parent=1 // pred_region
      _
    $region37: #{tpu_custom_call.1} parent=1 // pred_fallthru
      _
    // Predicated region
    $region38: #{tpu_custom_call.1} parent=1 // pred_check
      _
    $region39: #{tpu_custom_call.1} parent=1 // pred_check_branch
      %85 = sbr.rel (0) target = $region41
    $region40: #{tpu_custom_call.1} parent=1 // pred_region
      %86 = dma.done [#allocation4], 32
    $region41: #{tpu_custom_call.1} parent=1 // pred_fallthru
      _
    // Predicated region
    $region42: #{tpu_custom_call.1} parent=1 // pred_check
      _
    $region43: #{tpu_custom_call.1} parent=1 // pred_check_branch
      %88 = sbr.rel (0) target = $region45
    $region44: #{tpu_custom_call.1} parent=1 // pred_region
      %89 = dma.done [#allocation7], 1024
    $region45: #{tpu_custom_call.1} parent=1 // pred_fallthru
      _
    // Predicated region
    $region46: #{tpu_custom_call.1} parent=1 // pred_check
      _
    $region47: #{tpu_custom_call.1} parent=1 // pred_check_branch
      %91 = sbr.rel (0) target = $region49
    $region48: #{tpu_custom_call.1} parent=1 // pred_region
      %92 = dma.done [#allocation7], 1024
    $region49: #{tpu_custom_call.1} parent=1 // pred_fallthru
      _
    // Predicated region
    $region50: #{tpu_custom_call.1} parent=1 // pred_check
      _
    $region51: #{tpu_custom_call.1} parent=1 // pred_check_branch
      %94 = sbr.rel (0) target = $region53
    $region52: #{tpu_custom_call.1} parent=1 // pred_region
      %95 = dma.done [#allocation10], 1024
    $region53: #{tpu_custom_call.1} parent=1 // pred_fallthru
      _
    // Predicated region
    $region54: #{tpu_custom_call.1} parent=1 // pred_check
      _
    $region55: #{tpu_custom_call.1} parent=1 // pred_check_branch
      %97 = sbr.rel (0) target = $region57
    $region56: #{tpu_custom_call.1} parent=1 // pred_region
      %98 = dma.done [#allocation10], 1024
    $region57: #{tpu_custom_call.1} parent=1 // pred_fallthru
      _
    %100 = vst [vmem:[#allocation2] sm:$0x1] 0
    %v101 = vld [vmem:[#allocation3] sm:$0x3]
    %v102 = vpack.c.bf16 %v101, %v101
    %vm103 = vcmask 24576
    %104 = vst.msk [vmem:[#allocation2] sm:$0x1] %vm103, %v102
    %v105 = vld [vmem:[#allocation2] sm:$0x1]
    %v106 = vld [vmem:[#allocation6] sm:$0xf]
    %v107 = vld [vmem:[#allocation6 + $0x4] sm:$0xf]
    %v108 = vld [vmem:[#allocation6 + $0x8] sm:$0xf]
    %v109 = vld [vmem:[#allocation6 + $0xc] sm:$0xf]
    %v110 = vld [vmem:[#allocation6 + $0x10] sm:$0xf]
    %v111 = vld [vmem:[#allocation6 + $0x14] sm:$0xf]
    %v112 = vld [vmem:[#allocation6 + $0x18] sm:$0xf]
    %v113 = vld [vmem:[#allocation6 + $0x1c] sm:$0xf]
    %v114 = vld [vmem:[#allocation6 + $0x20] sm:$0xf]
    %v115 = vld [vmem:[#allocation6 + $0x24] sm:$0xf]
    %v116 = vld [vmem:[#allocation6 + $0x28] sm:$0xf]
    %v117 = vld [vmem:[#allocation6 + $0x2c] sm:$0xf]
    %v118 = vld [vmem:[#allocation6 + $0x30] sm:$0xf]
    %v119 = vld [vmem:[#allocation6 + $0x34] sm:$0xf]
    %v120 = vld [vmem:[#allocation6 + $0x38] sm:$0xf]
    %v121 = vld [vmem:[#allocation6 + $0x3c] sm:$0xf]
    %v122 = vld [vmem:[%s2] sm:$0x1]
    %v124 = vlaneseq
    %v125 = vshrl.u32 %v124, 7
    %v126 = vsub.s32 0, %v125
    %v127 = vrot.slane %v122, %v126
    %v145 = vunpack.c.l.b16 %v106
    %v146 = vunpack.c.l.b16 %v107
    %v147 = vunpack.c.l.b16 %v108
    %v148 = vunpack.c.l.b16 %v109
    %v149 = vunpack.c.l.b16 %v110
    %v150 = vunpack.c.l.b16 %v111
    %v151 = vunpack.c.l.b16 %v112
    %v152 = vunpack.c.l.b16 %v113
    %v153 = vunpack.c.l.b16 %v114
    %v154 = vunpack.c.l.b16 %v115
    %v155 = vunpack.c.l.b16 %v116
    %v156 = vunpack.c.l.b16 %v117
    %v157 = vunpack.c.l.b16 %v118
    %v158 = vunpack.c.l.b16 %v119
    %v159 = vunpack.c.l.b16 %v120
    %v160 = vunpack.c.l.b16 %v121
    %v161 = vpack.c.b16 %v146, %v145
    %v162 = vpack.c.b16 %v148, %v147
    %v163 = vpack.c.b16 %v150, %v149
    %v164 = vpack.c.b16 %v152, %v151
    %v165 = vpack.c.b16 %v154, %v153
    %v166 = vpack.c.b16 %v156, %v155
    %v167 = vpack.c.b16 %v158, %v157
    %v168 = vpack.c.b16 %v160, %v159
    %177 = vmatprep.subr.bf16.mxu0 0
    %178 = vmatpush1.bf16.msra.mxu0 %v161
    %179 = vmatprep.subr.bf16.mxu0 0
    %180 = vmatpush1.bf16.msra.mxu0 %v162
    %181 = vmatprep.subr.bf16.mxu0 0
    %182 = vmatpush1.bf16.msra.mxu0 %v163
    %183 = vmatprep.subr.bf16.mxu0 0
    %184 = vmatpush1.bf16.msra.mxu0 %v164
    %185 = vmatprep.subr.bf16.mxu0 0
    %186 = vmatpush1.bf16.msra.mxu0 %v165
    %187 = vmatprep.subr.bf16.mxu0 0
    %188 = vmatpush1.bf16.msra.mxu0 %v166
    %189 = vmatprep.subr.bf16.mxu0 0
    %190 = vmatpush1.bf16.msra.mxu0 %v167
    %191 = vmatprep.subr.bf16.mxu0 0
    %192 = vmatpush1.bf16.msra.mxu0 %v168
    %193 = vmatprep.subr.bf16.mxu0 0
    %194 = vmatpush1.bf16.msra.mxu0 0
    %195 = vmatprep.subr.bf16.mxu0 0
    %196 = vmatpush1.bf16.msra.mxu0 0
    %197 = vmatprep.subr.bf16.mxu0 0
    %198 = vmatpush1.bf16.msra.mxu0 0
    %199 = vmatprep.subr.bf16.mxu0 0
    %200 = vmatpush1.bf16.msra.mxu0 0
    %201 = vmatprep.subr.bf16.mxu0 0
    %202 = vmatpush1.bf16.msra.mxu0 0
    %203 = vmatprep.subr.bf16.mxu0 0
    %204 = vmatpush1.bf16.msra.mxu0 0
    %205 = vmatprep.subr.bf16.mxu0 0
    %206 = vmatpush1.bf16.msra.mxu0 0
    %207 = vmatprep.subr.bf16.mxu0 0
    %208 = vmatpush1.bf16.msra.mxu0 0
    %209 = vmatprep.mubr.bf16.mxu0 0
    %210 = vmatmul.mubr.bf16.gmra.mrb[0].mxu0 %v105
    %v211 = vpop.f32.mrb[0].mxu0
    %v212 = vadd.f32 %v127, %v211
    %v213 = vpop.f32.mrb[0].mxu0
    %v214 = vpop.f32.mrb[0].mxu0
    %v215 = vpop.f32.mrb[0].mxu0
    %216 = vdwg.mxu0
    %v217 = vmax.f32 %v212, 0.0
    %v218 = vpack.c.bf16 %v217, %v217
    %v219 = vld [vmem:[#allocation8] sm:$0xf]
    %v220 = vld [vmem:[#allocation8 + $0x4] sm:$0xf]
    %v221 = vld [vmem:[#allocation8 + $0x8] sm:$0xf]
    %v222 = vld [vmem:[#allocation8 + $0xc] sm:$0xf]
    %v223 = vld [vmem:[#allocation8 + $0x10] sm:$0xf]
    %v224 = vld [vmem:[#allocation8 + $0x14] sm:$0xf]
    %v225 = vld [vmem:[#allocation8 + $0x18] sm:$0xf]
    %v226 = vld [vmem:[#allocation8 + $0x1c] sm:$0xf]
    %v227 = vld [vmem:[#allocation8 + $0x20] sm:$0xf]
    %v228 = vld [vmem:[#allocation8 + $0x24] sm:$0xf]
    %v229 = vld [vmem:[#allocation8 + $0x28] sm:$0xf]
    %v230 = vld [vmem:[#allocation8 + $0x2c] sm:$0xf]
    %v231 = vld [vmem:[#allocation8 + $0x30] sm:$0xf]
    %v232 = vld [vmem:[#allocation8 + $0x34] sm:$0xf]
    %v233 = vld [vmem:[#allocation8 + $0x38] sm:$0xf]
    %v234 = vld [vmem:[#allocation8 + $0x3c] sm:$0xf]
    %v235 = vld [vmem:[%s4] sm:$0x1]
    %v237 = vlaneseq
    %v238 = vshrl.u32 %v237, 7
    %v239 = vsub.s32 0, %v238
    %v240 = vrot.slane %v235, %v239
    %v258 = vunpack.c.l.b16 %v219
    %v259 = vunpack.c.l.b16 %v220
    %v260 = vunpack.c.l.b16 %v221
    %v261 = vunpack.c.l.b16 %v222
    %v262 = vunpack.c.l.b16 %v223
    %v263 = vunpack.c.l.b16 %v224
    %v264 = vunpack.c.l.b16 %v225
    %v265 = vunpack.c.l.b16 %v226
    %v266 = vunpack.c.l.b16 %v227
    %v267 = vunpack.c.l.b16 %v228
    %v268 = vunpack.c.l.b16 %v229
    %v269 = vunpack.c.l.b16 %v230
    %v270 = vunpack.c.l.b16 %v231
    %v271 = vunpack.c.l.b16 %v232
    %v272 = vunpack.c.l.b16 %v233
    %v273 = vunpack.c.l.b16 %v234
    %v274 = vpack.c.b16 %v259, %v258
    %v275 = vpack.c.b16 %v261, %v260
    %v276 = vpack.c.b16 %v263, %v262
    %v277 = vpack.c.b16 %v265, %v264
    %v278 = vpack.c.b16 %v267, %v266
    %v279 = vpack.c.b16 %v269, %v268
    %v280 = vpack.c.b16 %v271, %v270
    %v281 = vpack.c.b16 %v273, %v272
    %290 = vmatprep.subr.bf16.mxu0 0
    %291 = vmatpush1.bf16.msra.mxu0 %v274
    %292 = vmatprep.subr.bf16.mxu0 0
    %293 = vmatpush1.bf16.msra.mxu0 %v275
    %294 = vmatprep.subr.bf16.mxu0 0
    %295 = vmatpush1.bf16.msra.mxu0 %v276
    %296 = vmatprep.subr.bf16.mxu0 0
    %297 = vmatpush1.bf16.msra.mxu0 %v277
    %298 = vmatprep.subr.bf16.mxu0 0
    %299 = vmatpush1.bf16.msra.mxu0 %v278
    %300 = vmatprep.subr.bf16.mxu0 0
    %301 = vmatpush1.bf16.msra.mxu0 %v279
    %302 = vmatprep.subr.bf16.mxu0 0
    %303 = vmatpush1.bf16.msra.mxu0 %v280
    %304 = vmatprep.subr.bf16.mxu0 0
    %305 = vmatpush1.bf16.msra.mxu0 %v281
    %306 = vmatprep.subr.bf16.mxu0 0
    %307 = vmatpush1.bf16.msra.mxu0 0
    %308 = vmatprep.subr.bf16.mxu0 0
    %309 = vmatpush1.bf16.msra.mxu0 0
    %310 = vmatprep.subr.bf16.mxu0 0
    %311 = vmatpush1.bf16.msra.mxu0 0
    %312 = vmatprep.subr.bf16.mxu0 0
    %313 = vmatpush1.bf16.msra.mxu0 0
    %314 = vmatprep.subr.bf16.mxu0 0
    %315 = vmatpush1.bf16.msra.mxu0 0
    %316 = vmatprep.subr.bf16.mxu0 0
    %317 = vmatpush1.bf16.msra.mxu0 0
    %318 = vmatprep.subr.bf16.mxu0 0
    %319 = vmatpush1.bf16.msra.mxu0 0
    %320 = vmatprep.subr.bf16.mxu0 0
    %321 = vmatpush1.bf16.msra.mxu0 0
    %322 = vmatprep.mubr.bf16.mxu0 0
    %323 = vmatmul.mubr.bf16.gmra.mrb[0].mxu0 %v218
    %v324 = vpop.f32.mrb[0].mxu0
    %v325 = vadd.f32 %v240, %v324
    %v326 = vpop.f32.mrb[0].mxu0
    %v327 = vpop.f32.mrb[0].mxu0
    %v328 = vpop.f32.mrb[0].mxu0
    %329 = vdwg.mxu0
    %v330 = vmax.f32 %v325, 0.0
    %v331 = vpack.c.bf16 %v330, %v330
    %v332 = vld [vmem:[#allocation9] sm:$0xf]
    %v333 = vld [vmem:[#allocation9 + $0x4] sm:$0xf]
    %v334 = vld [vmem:[#allocation9 + $0x8] sm:$0xf]
    %v335 = vld [vmem:[#allocation9 + $0xc] sm:$0xf]
    %v336 = vld [vmem:[#allocation9 + $0x10] sm:$0xf]
    %v337 = vld [vmem:[#allocation9 + $0x14] sm:$0xf]
    %v338 = vld [vmem:[#allocation9 + $0x18] sm:$0xf]
    %v339 = vld [vmem:[#allocation9 + $0x1c] sm:$0xf]
    %v340 = vld [vmem:[#allocation9 + $0x20] sm:$0xf]
    %v341 = vld [vmem:[#allocation9 + $0x24] sm:$0xf]
    %v342 = vld [vmem:[#allocation9 + $0x28] sm:$0xf]
    %v343 = vld [vmem:[#allocation9 + $0x2c] sm:$0xf]
    %v344 = vld [vmem:[#allocation9 + $0x30] sm:$0xf]
    %v345 = vld [vmem:[#allocation9 + $0x34] sm:$0xf]
    %v346 = vld [vmem:[#allocation9 + $0x38] sm:$0xf]
    %v347 = vld [vmem:[#allocation9 + $0x3c] sm:$0xf]
    %v348 = vld [vmem:[%s6] sm:$0x1]
    %v350 = vlaneseq
    %v351 = vshrl.u32 %v350, 7
    %v352 = vsub.s32 0, %v351
    %v353 = vrot.slane %v348, %v352
    %v371 = vunpack.c.l.b16 %v332
    %v372 = vunpack.c.l.b16 %v333
    %v373 = vunpack.c.l.b16 %v334
    %v374 = vunpack.c.l.b16 %v335
    %v375 = vunpack.c.l.b16 %v336
    %v376 = vunpack.c.l.b16 %v337
    %v377 = vunpack.c.l.b16 %v338
    %v378 = vunpack.c.l.b16 %v339
    %v379 = vunpack.c.l.b16 %v340
    %v380 = vunpack.c.l.b16 %v341
    %v381 = vunpack.c.l.b16 %v342
    %v382 = vunpack.c.l.b16 %v343
    %v383 = vunpack.c.l.b16 %v344
    %v384 = vunpack.c.l.b16 %v345
    %v385 = vunpack.c.l.b16 %v346
    %v386 = vunpack.c.l.b16 %v347
    %v387 = vpack.c.b16 %v372, %v371
    %v388 = vpack.c.b16 %v374, %v373
    %v389 = vpack.c.b16 %v376, %v375
    %v390 = vpack.c.b16 %v378, %v377
    %v391 = vpack.c.b16 %v380, %v379
    %v392 = vpack.c.b16 %v382, %v381
    %v393 = vpack.c.b16 %v384, %v383
    %v394 = vpack.c.b16 %v386, %v385
    %403 = vmatprep.subr.bf16.mxu0 0
    %404 = vmatpush1.bf16.msra.mxu0 %v387
    %405 = vmatprep.subr.bf16.mxu0 0
    %406 = vmatpush1.bf16.msra.mxu0 %v388
    %407 = vmatprep.subr.bf16.mxu0 0
    %408 = vmatpush1.bf16.msra.mxu0 %v389
    %409 = vmatprep.subr.bf16.mxu0 0
    %410 = vmatpush1.bf16.msra.mxu0 %v390
    %411 = vmatprep.subr.bf16.mxu0 0
    %412 = vmatpush1.bf16.msra.mxu0 %v391
    %413 = vmatprep.subr.bf16.mxu0 0
    %414 = vmatpush1.bf16.msra.mxu0 %v392
    %415 = vmatprep.subr.bf16.mxu0 0
    %416 = vmatpush1.bf16.msra.mxu0 %v393
    %417 = vmatprep.subr.bf16.mxu0 0
    %418 = vmatpush1.bf16.msra.mxu0 %v394
    %419 = vmatprep.subr.bf16.mxu0 0
    %420 = vmatpush1.bf16.msra.mxu0 0
    %421 = vmatprep.subr.bf16.mxu0 0
    %422 = vmatpush1.bf16.msra.mxu0 0
    %423 = vmatprep.subr.bf16.mxu0 0
    %424 = vmatpush1.bf16.msra.mxu0 0
    %425 = vmatprep.subr.bf16.mxu0 0
    %426 = vmatpush1.bf16.msra.mxu0 0
    %427 = vmatprep.subr.bf16.mxu0 0
    %428 = vmatpush1.bf16.msra.mxu0 0
    %429 = vmatprep.subr.bf16.mxu0 0
    %430 = vmatpush1.bf16.msra.mxu0 0
    %431 = vmatprep.subr.bf16.mxu0 0
    %432 = vmatpush1.bf16.msra.mxu0 0
    %433 = vmatprep.subr.bf16.mxu0 0
    %434 = vmatpush1.bf16.msra.mxu0 0
    %435 = vmatprep.mubr.bf16.mxu0 0
    %436 = vmatmul.mubr.bf16.gmra.mrb[0].mxu0 %v331
    %v437 = vpop.f32.mrb[0].mxu0
    %v438 = vadd.f32 %v353, %v437
    %v439 = vpop.f32.mrb[0].mxu0
    %v440 = vpop.f32.mrb[0].mxu0
    %v441 = vpop.f32.mrb[0].mxu0
    %442 = vdwg.mxu0
    %v443 = vmax.f32 %v438, 0.0
    %v444 = vpack.c.bf16 %v443, %v443
    %v445 = vld [vmem:[#allocation11] sm:$0xf]
    %v446 = vld [vmem:[#allocation11 + $0x4] sm:$0xf]
    %v447 = vld [vmem:[#allocation11 + $0x8] sm:$0xf]
    %v448 = vld [vmem:[#allocation11 + $0xc] sm:$0xf]
    %v449 = vld [vmem:[#allocation11 + $0x10] sm:$0xf]
    %v450 = vld [vmem:[#allocation11 + $0x14] sm:$0xf]
    %v451 = vld [vmem:[#allocation11 + $0x18] sm:$0xf]
    %v452 = vld [vmem:[#allocation11 + $0x1c] sm:$0xf]
    %v453 = vld [vmem:[#allocation11 + $0x20] sm:$0xf]
    %v454 = vld [vmem:[#allocation11 + $0x24] sm:$0xf]
    %v455 = vld [vmem:[#allocation11 + $0x28] sm:$0xf]
    %v456 = vld [vmem:[#allocation11 + $0x2c] sm:$0xf]
    %v457 = vld [vmem:[#allocation11 + $0x30] sm:$0xf]
    %v458 = vld [vmem:[#allocation11 + $0x34] sm:$0xf]
    %v459 = vld [vmem:[#allocation11 + $0x38] sm:$0xf]
    %v460 = vld [vmem:[#allocation11 + $0x3c] sm:$0xf]
    %v461 = vld [vmem:[%s8] sm:$0x1]
    %v463 = vlaneseq
    %v464 = vshrl.u32 %v463, 7
    %v465 = vsub.s32 0, %v464
    %v466 = vrot.slane %v461, %v465
    %v484 = vunpack.c.l.b16 %v445
    %v485 = vunpack.c.l.b16 %v446
    %v486 = vunpack.c.l.b16 %v447
    %v487 = vunpack.c.l.b16 %v448
    %v488 = vunpack.c.l.b16 %v449
    %v489 = vunpack.c.l.b16 %v450
    %v490 = vunpack.c.l.b16 %v451
    %v491 = vunpack.c.l.b16 %v452
    %v492 = vunpack.c.l.b16 %v453
    %v493 = vunpack.c.l.b16 %v454
    %v494 = vunpack.c.l.b16 %v455
    %v495 = vunpack.c.l.b16 %v456
    %v496 = vunpack.c.l.b16 %v457
    %v497 = vunpack.c.l.b16 %v458
    %v498 = vunpack.c.l.b16 %v459
    %v499 = vunpack.c.l.b16 %v460
    %v500 = vpack.c.b16 %v485, %v484
    %v501 = vpack.c.b16 %v487, %v486
    %v502 = vpack.c.b16 %v489, %v488
    %v503 = vpack.c.b16 %v491, %v490
    %v504 = vpack.c.b16 %v493, %v492
    %v505 = vpack.c.b16 %v495, %v494
    %v506 = vpack.c.b16 %v497, %v496
    %v507 = vpack.c.b16 %v499, %v498
    %516 = vmatprep.subr.bf16.mxu0 0
    %517 = vmatpush1.bf16.msra.mxu0 %v500
    %518 = vmatprep.subr.bf16.mxu0 0
    %519 = vmatpush1.bf16.msra.mxu0 %v501
    %520 = vmatprep.subr.bf16.mxu0 0
    %521 = vmatpush1.bf16.msra.mxu0 %v502
    %522 = vmatprep.subr.bf16.mxu0 0
    %523 = vmatpush1.bf16.msra.mxu0 %v503
    %524 = vmatprep.subr.bf16.mxu0 0
    %525 = vmatpush1.bf16.msra.mxu0 %v504
    %526 = vmatprep.subr.bf16.mxu0 0
    %527 = vmatpush1.bf16.msra.mxu0 %v505
    %528 = vmatprep.subr.bf16.mxu0 0
    %529 = vmatpush1.bf16.msra.mxu0 %v506
    %530 = vmatprep.subr.bf16.mxu0 0
    %531 = vmatpush1.bf16.msra.mxu0 %v507
    %532 = vmatprep.subr.bf16.mxu0 0
    %533 = vmatpush1.bf16.msra.mxu0 0
    %534 = vmatprep.subr.bf16.mxu0 0
    %535 = vmatpush1.bf16.msra.mxu0 0
    %536 = vmatprep.subr.bf16.mxu0 0
    %537 = vmatpush1.bf16.msra.mxu0 0
    %538 = vmatprep.subr.bf16.mxu0 0
    %539 = vmatpush1.bf16.msra.mxu0 0
    %540 = vmatprep.subr.bf16.mxu0 0
    %541 = vmatpush1.bf16.msra.mxu0 0
    %542 = vmatprep.subr.bf16.mxu0 0
    %543 = vmatpush1.bf16.msra.mxu0 0
    %544 = vmatprep.subr.bf16.mxu0 0
    %545 = vmatpush1.bf16.msra.mxu0 0
    %546 = vmatprep.subr.bf16.mxu0 0
    %547 = vmatpush1.bf16.msra.mxu0 0
    %548 = vmatprep.mubr.bf16.mxu0 0
    %549 = vmatmul.mubr.bf16.gmra.mrb[0].mxu0 %v444
    %v550 = vpop.f32.mrb[0].mxu0
    %v551 = vadd.f32 %v466, %v550
    %v552 = vpop.f32.mrb[0].mxu0
    %v553 = vpop.f32.mrb[0].mxu0
    %v554 = vpop.f32.mrb[0].mxu0
    %555 = vdwg.mxu0
    %v556 = vmax.f32 %v551, 0.0
    %v557 = vpack.c.bf16 %v556, %v556
    %558 = vst [vmem:[#allocation12] sm:$0x1] %v557
    // Predicated region
    $region58: #{tpu_custom_call.1} parent=1 // pred_check
      _
    $region59: #{tpu_custom_call.1} parent=1 // pred_check_branch
      %560 = sbr.rel (0) target = $region61
    $region60: #{tpu_custom_call.1} parent=1 // pred_region
      %s562 = ssub.s32 16, 16
      %563 = vsyncadd [#allocation5], %s562
      %s565 = sshll.u32 [#allocation12], 4
      %s566 = int_to_ptr.vmem [resolvable:$true] %s565
      %568 = dma.vmem_to_hbm [thread:$0]  %s566, 16, %s9, [#allocation5]
    $region61: #{tpu_custom_call.1} parent=1 // pred_fallthru
      _
    // Predicated region
    $region62: #{tpu_custom_call.1} parent=1 // pred_check
      _
    $region63: #{tpu_custom_call.1} parent=1 // pred_check_branch
      %570 = sbr.rel (0) target = $region65
    $region64: #{tpu_custom_call.1} parent=1 // pred_region
      %571 = dma.done [#allocation5], 16
    $region65: #{tpu_custom_call.1} parent=1 // pred_fallthru
      _
    %572 = vsyncpa [#allocation4], 1
    %573 = vsyncpa [#allocation7], 1
    %574 = vsyncpa [#allocation10], 1
    %575 = vsyncpa [#allocation5], 1

</llo_original>
